<compile_context>
chip_gen: v5e
topology: v5e:2x2
jax: 0.10.0
libtpu: 0.0.40
codegen_flags: <defaults>
</compile_context>

<pallas_src>
import math
import functools

import jax
import jax.numpy as jnp
from jax.experimental import pallas as pl
from jax.experimental.pallas import tpu as pltpu

# ---- "cfg" values (synthetic, deterministic) --------------------------------
ARC_SCALE = 64.0       # cfg.LOSS.ARC.SCALE
ARC_MARGIN = 0.5
NCLASSES = 16          # cfg.LOSS.ARC.NCLASSES
EMBED_DIM = 32         # cfg.LOSS.ARC.EMBED_DIM
L5_SCALE = 1.0         # cfg.LOSS.ARC.L5_SCALE (nonzero -> L5 term active)
L6_SCALE = 1.0         # cfg.LOSS.ARC.L6_SCALE (nonzero -> L6 term active)

COS_M = math.cos(ARC_MARGIN)
SIN_M = math.sin(ARC_MARGIN)
THETA = math.cos(math.pi - ARC_MARGIN)
SINMM = math.sin(math.pi - ARC_MARGIN) * ARC_MARGIN
CLAMP_EPS = 1e-4
NORM_EPS = 1e-12  # torch F.normalize default


def _row_normalize(x):
    """x / max(||x||, eps) via rsqrt (EUP) instead of sqrt + divide."""
    ss = jnp.sum(x * x, axis=-1, keepdims=True)
    return x * jax.lax.rsqrt(jnp.maximum(ss, NORM_EPS * NORM_EPS))


# -----------------------------------------------------------------------------
# Fused kernel: normalize -> cosine logits -> W·Wᵀ gram -> ArcFace margin ->
#               scale -> cross-entropy reduced to a scalar.
# -----------------------------------------------------------------------------
def arcface_fused_kernel(labels_ref, emb_ref, w_ref,
                         margin_ref, cos_ref, wwt_ref, ce_ref):
    emb = emb_ref[...].astype(jnp.float32)      # (B, D)
    w = w_ref[...].astype(jnp.float32)          # (C, D)
    lab = labels_ref[...]                       # (B, 1) int32

    emb_n = _row_normalize(emb)
    w_n = _row_normalize(w)

    # cosine logits: (B, C) — contract feature dims (no explicit transpose of w_n)
    cos = jax.lax.dot_general(emb_n, w_n, (((1,), (1,)), ((), ())),
                              preferred_element_type=jnp.float32)
    cos_ref[...] = cos

    # class-vs-class gram for L6 (clamped here; arccos + triu sum done in the wrapper)
    wwt = jax.lax.dot_general(w_n, w_n, (((1,), (1,)), ((), ())),
                              preferred_element_type=jnp.float32)
    wwt_ref[...] = jnp.clip(wwt, -1.0 + CLAMP_EPS, 1.0 - CLAMP_EPS)

    logits = jnp.clip(cos, -1.0 + CLAMP_EPS, 1.0 - CLAMP_EPS)

    # build the target mask in-kernel from labels (no (B, C) one-hot DMA)
    B, C = logits.shape
    col = jax.lax.broadcasted_iota(jnp.int32, (B, C), 1)
    valid = lab != -1                                         # (B, 1) bool
    onehot = jnp.where((col == lab) & valid, 1.0, 0.0)        # (B, C) f32

    target = jnp.sum(logits * onehot, axis=-1, keepdims=True)           # (B, 1)
    sin_theta = jnp.sqrt(jnp.maximum(1.0 - target * target, 0.0))
    cos_theta_m = target * COS_M - sin_theta * SIN_M
    final = jnp.where(target > THETA, cos_theta_m, target - SINMM)      # easy_margin=False

    margin_logits = jnp.where(onehot > 0.0, final, logits) * ARC_SCALE  # (B, C)
    margin_ref[...] = margin_logits

    # cross-entropy, mean over rows, reduced to a single scalar in SMEM
    # TODO(synk): rows with label == -1 contribute logsumexp only (torch's default
    #             ignore_index is -100, so -1 is not special-cased there either).
    m = jnp.max(margin_logits, axis=-1, keepdims=True)
    lse = m + jnp.log(jnp.sum(jnp.exp(margin_logits - m), axis=-1, keepdims=True))
    tgt = jnp.sum(margin_logits * onehot, axis=-1, keepdims=True)
    ce_ref[0, 0] = jnp.sum(lse - tgt) * (1.0 / B)


# -----------------------------------------------------------------------------
# Wrapper
# -----------------------------------------------------------------------------
def run_arcface_fused(labels2d, emb, weight):
    B, D = emb.shape
    C = weight.shape[0]
    return pl.pallas_call(
        arcface_fused_kernel,
        out_shape=(jax.ShapeDtypeStruct((B, C), jnp.float32),   # margin logits
                   jax.ShapeDtypeStruct((B, C), jnp.float32),   # raw cosine logits
                   jax.ShapeDtypeStruct((C, C), jnp.float32),   # clamped W·Wᵀ
                   jax.ShapeDtypeStruct((1, 1), jnp.float32)),  # mean cross-entropy
        in_specs=[pl.BlockSpec((B, 1), lambda: (0, 0)),
                  pl.BlockSpec((B, D), lambda: (0, 0)),
                  pl.BlockSpec((C, D), lambda: (0, 0))],
        out_specs=(pl.BlockSpec((B, C), lambda: (0, 0)),
                   pl.BlockSpec((B, C), lambda: (0, 0)),
                   pl.BlockSpec((C, C), lambda: (0, 0)),
                   pl.BlockSpec(memory_space=pltpu.SMEM)),
    )(labels2d, emb, weight)


@functools.partial(jax.jit, static_argnames=())
def arcface_forward(embeddings, labels, weight):
    """Full ArcFace.forward: CE(margin_logits, labels) + L6 + L5."""
    C = weight.shape[0]
    labels = labels.reshape(-1).astype(jnp.int32)

    margin_logits, cos_logits, wwt, ce = run_arcface_fused(
        labels[:, None], embeddings.astype(jnp.float32), weight.astype(jnp.float32))
    ce_loss = ce[0, 0]

    # ----- L6: inter-cluster distance over all class pairs -----
    if L6_SCALE:
        pair_mask = jnp.triu(jnp.ones((C, C), jnp.float32), k=1)       # i < j pairs
        l6 = jnp.sum(jnp.arccos(wwt) * pair_mask)
        l6 = l6 / (-3.14 * (C - 1)) * L6_SCALE
    else:
        l6 = 0.0

    # ----- L5: intra-cluster compactness (faithful to reference's ROW indexing) -----
    if L5_SCALE:
        rows = jnp.take(cos_logits, labels, axis=0, mode="clip")       # logits[labels]
        rows = jnp.clip(rows, -1.0, 1.0)                               # numerical guard only
        l5 = jnp.mean(jnp.arccos(rows)) / 3.14
    else:
        l5 = 0.0

    return ce_loss + l6 + l5, margin_logits


# -----------------------------------------------------------------------------
# Pure-JAX reference of the same math, for a sanity check
# -----------------------------------------------------------------------------
def arcface_forward_ref(embeddings, labels, weight):
    labels = labels.reshape(-1).astype(jnp.int32)
    C = weight.shape[0]
    emb_n = _row_normalize(embeddings.astype(jnp.float32))
    w_n = _row_normalize(weight.astype(jnp.float32))
    cos = emb_n @ w_n.T
    logits = jnp.clip(cos, -1.0 + CLAMP_EPS, 1.0 - CLAMP_EPS)
    onehot = ((labels[:, None] == jnp.arange(C)[None, :]) &
              (labels != -1)[:, None]).astype(jnp.float32)
    target = jnp.sum(logits * onehot, axis=-1, keepdims=True)
    sin_t = jnp.sqrt(jnp.maximum(1.0 - target * target, 0.0))
    ctm = target * COS_M - sin_t * SIN_M
    final = jnp.where(target > THETA, ctm, target - SINMM)
    ml = jnp.where(onehot > 0, final, logits) * ARC_SCALE
    lse = jax.scipy.special.logsumexp(ml, axis=-1)
    ce = jnp.mean(lse - jnp.sum(ml * onehot, axis=-1))
    sim = jnp.clip(w_n @ w_n.T, -1.0 + CLAMP_EPS, 1.0 - CLAMP_EPS)
    mask = jnp.triu(jnp.ones((C, C), jnp.float32), k=1)
    l6 = jnp.sum(jnp.arccos(sim) * mask) / (-3.14 * (C - 1)) * L6_SCALE
    rows = jnp.clip(jnp.take(cos, labels, axis=0, mode="clip"), -1.0, 1.0)
    l5 = jnp.mean(jnp.arccos(rows)) / 3.14
    return ce + l6 + l5, ml


if __name__ == "__main__":
    # get_l5 in the original module indexes the (B, C) logits by label value along the
    # batch axis, so labels must be < B: use B = NCLASSES for the demo.
    B = NCLASSES
    key = jax.random.PRNGKey(0)
    k_emb, k_w, k_lab = jax.random.split(key, 3)

    embeddings = jax.random.normal(k_emb, (B, EMBED_DIM), dtype=jnp.float32)
    weight = 0.01 * jax.random.normal(k_w, (NCLASSES, EMBED_DIM), dtype=jnp.float32)
    labels = jax.random.randint(k_lab, (B,), 0, NCLASSES, dtype=jnp.int32)

    loss, margin_logits = arcface_forward(embeddings, labels, weight)
    jax.block_until_ready((loss, margin_logits))

    ref_loss, ref_ml = arcface_forward_ref(embeddings, labels, weight)
    assert bool(jnp.isfinite(loss)), ("non-finite loss", loss)
    assert jnp.allclose(loss, ref_loss, rtol=1e-3, atol=1e-3), (loss, ref_loss)
    assert jnp.allclose(margin_logits, ref_ml, rtol=1e-3, atol=1e-3)

    print("KERNEL_OK")
</pallas_src>

<mosaic_0001>
module attributes {stable_mosaic.version = 11 : i64} {
  func.func @arcface_fused_kernel(%arg0: memref<16x1xi32, #tpu.memory_space<vmem>>, %arg1: memref<16x32xf32, #tpu.memory_space<vmem>>, %arg2: memref<16x32xf32, #tpu.memory_space<vmem>>, %arg3: memref<16x16xf32, #tpu.memory_space<vmem>>, %arg4: memref<16x16xf32, #tpu.memory_space<vmem>>, %arg5: memref<16x16xf32, #tpu.memory_space<vmem>>, %arg6: memref<1x1xf32, #tpu.memory_space<smem>>) attributes {dimension_semantics = [], scalar_prefetch = 0 : i64, scratch_operands = 0 : i64, tpu.core_type = #tpu.core_type<tc>} {
    %c0 = arith.constant 0 : index
    %c0_0 = arith.constant 0 : index
    %0 = vector.load %arg1[%c0, %c0_0] : memref<16x32xf32, #tpu.memory_space<vmem>>, vector<16x32xf32>
    %c0_1 = arith.constant 0 : index
    %c0_2 = arith.constant 0 : index
    %1 = vector.load %arg2[%c0_1, %c0_2] : memref<16x32xf32, #tpu.memory_space<vmem>>, vector<16x32xf32>
    %c0_3 = arith.constant 0 : index
    %c0_4 = arith.constant 0 : index
    %2 = vector.load %arg0[%c0_3, %c0_4] : memref<16x1xi32, #tpu.memory_space<vmem>>, vector<16x1xi32>
    %3 = arith.mulf %0, %0 : vector<16x32xf32>
    %cst = arith.constant dense<0.000000e+00> : vector<16xf32>
    %4 = vector.multi_reduction <add>, %3, %cst [1] : vector<16x32xf32> to vector<16xf32>
    %5 = vector.shape_cast %4 : vector<16xf32> to vector<16x1xf32>
    %cst_5 = arith.constant 1.000000e-24 : f32
    %6 = vector.broadcast %cst_5 : f32 to vector<16x1xf32>
    %7 = arith.maximumf %5, %6 : vector<16x1xf32>
    %8 = math.rsqrt %7 : vector<16x1xf32>
    %9 = vector.broadcast %8 : vector<16x1xf32> to vector<16x32xf32>
    %10 = arith.mulf %0, %9 : vector<16x32xf32>
    %11 = arith.mulf %1, %1 : vector<16x32xf32>
    %cst_6 = arith.constant dense<0.000000e+00> : vector<16xf32>
    %12 = vector.multi_reduction <add>, %11, %cst_6 [1] : vector<16x32xf32> to vector<16xf32>
    %13 = vector.shape_cast %12 : vector<16xf32> to vector<16x1xf32>
    %cst_7 = arith.constant 1.000000e-24 : f32
    %14 = vector.broadcast %cst_7 : f32 to vector<16x1xf32>
    %15 = arith.maximumf %13, %14 : vector<16x1xf32>
    %16 = math.rsqrt %15 : vector<16x1xf32>
    %17 = vector.broadcast %16 : vector<16x1xf32> to vector<16x32xf32>
    %18 = arith.mulf %1, %17 : vector<16x32xf32>
    %cst_8 = arith.constant dense<0.000000e+00> : vector<16x16xf32>
    %19 = tpu.matmul %10, %18, %cst_8 {dimension_numbers = #tpu.dot_dimension_numbers<[1], [1], [0], [0], [0, 0, 1, 0], [], []>} : vector<16x32xf32>, vector<16x32xf32>, vector<16x16xf32> -> vector<16x16xf32>
    %c0_9 = arith.constant 0 : index
    %c0_10 = arith.constant 0 : index
    %20 = vector.load %arg4[%c0_9, %c0_10] : memref<16x16xf32, #tpu.memory_space<vmem>>, vector<16x16xf32>
    tpu.vector_store %arg4[%c0_9, %c0_10], %19 {strides = array<i32>} : memref<16x16xf32, #tpu.memory_space<vmem>>, vector<16x16xf32>,
    %cst_11 = arith.constant dense<0.000000e+00> : vector<16x16xf32>
    %21 = tpu.matmul %18, %18, %cst_11 {dimension_numbers = #tpu.dot_dimension_numbers<[1], [1], [0], [0], [0, 0, 1, 0], [], []>} : vector<16x32xf32>, vector<16x32xf32>, vector<16x16xf32> -> vector<16x16xf32>
    %cst_12 = arith.constant -0.999899983 : f32
    %cst_13 = arith.constant 0.999899983 : f32
    %22 = vector.broadcast %cst_12 : f32 to vector<16x16xf32>
    %23 = arith.maximumf %22, %21 : vector<16x16xf32>
    %24 = vector.broadcast %cst_13 : f32 to vector<16x16xf32>
    %25 = arith.minimumf %24, %23 : vector<16x16xf32>
    %c0_14 = arith.constant 0 : index
    %c0_15 = arith.constant 0 : index
    %26 = vector.load %arg5[%c0_14, %c0_15] : memref<16x16xf32, #tpu.memory_space<vmem>>, vector<16x16xf32>
    tpu.vector_store %arg5[%c0_14, %c0_15], %25 {strides = array<i32>} : memref<16x16xf32, #tpu.memory_space<vmem>>, vector<16x16xf32>,
    %cst_16 = arith.constant -0.999899983 : f32
    %cst_17 = arith.constant 0.999899983 : f32
    %27 = vector.broadcast %cst_16 : f32 to vector<16x16xf32>
    %28 = arith.maximumf %27, %19 : vector<16x16xf32>
    %29 = vector.broadcast %cst_17 : f32 to vector<16x16xf32>
    %30 = arith.minimumf %29, %28 : vector<16x16xf32>
    %31 = tpu.iota {dimensions = array<i32: 1>} : vector<16x16xi32>
    %c-1_i32 = arith.constant -1 : i32
    %32 = vector.broadcast %c-1_i32 : i32 to vector<16x1xi32>
    %33 = arith.cmpi ne, %2, %32 : vector<16x1xi32>
    %34 = vector.broadcast %2 : vector<16x1xi32> to vector<16x16xi32>
    %35 = arith.cmpi eq, %31, %34 : vector<16x16xi32>
    %36 = vector.broadcast %33 : vector<16x1xi1> to vector<16x16xi1>
    %37 = arith.andi %35, %36 : vector<16x16xi1>
    %cst_18 = arith.constant 1.000000e+00 : f32
    %cst_19 = arith.constant 0.000000e+00 : f32
    %38 = vector.broadcast %cst_18 : f32 to vector<16x16xf32>
    %39 = vector.broadcast %cst_19 : f32 to vector<16x16xf32>
    %40 = arith.select %37, %38, %39 : vector<16x16xi1>, vector<16x16xf32>
    %41 = arith.mulf %30, %40 : vector<16x16xf32>
    %cst_20 = arith.constant dense<0.000000e+00> : vector<16xf32>
    %42 = vector.multi_reduction <add>, %41, %cst_20 [1] : vector<16x16xf32> to vector<16xf32>
    %43 = vector.shape_cast %42 : vector<16xf32> to vector<16x1xf32>
    %44 = arith.mulf %43, %43 : vector<16x1xf32>
    %cst_21 = arith.constant 1.000000e+00 : f32
    %45 = vector.broadcast %cst_21 : f32 to vector<16x1xf32>
    %46 = arith.subf %45, %44 : vector<16x1xf32>
    %cst_22 = arith.constant 0.000000e+00 : f32
    %47 = vector.broadcast %cst_22 : f32 to vector<16x1xf32>
    %48 = arith.maximumf %46, %47 : vector<16x1xf32>
    %49 = math.sqrt %48 : vector<16x1xf32>
    %cst_23 = arith.constant 0.87758255 : f32
    %50 = vector.broadcast %cst_23 : f32 to vector<16x1xf32>
    %51 = arith.mulf %43, %50 : vector<16x1xf32>
    %cst_24 = arith.constant 0.47942555 : f32
    %52 = vector.broadcast %cst_24 : f32 to vector<16x1xf32>
    %53 = arith.mulf %49, %52 : vector<16x1xf32>
    %54 = arith.subf %51, %53 : vector<16x1xf32>
    %cst_25 = arith.constant -0.87758255 : f32
    %55 = vector.broadcast %cst_25 : f32 to vector<16x1xf32>
    %56 = arith.cmpf ogt, %43, %55 : vector<16x1xf32>
    %cst_26 = arith.constant 0.239712775 : f32
    %57 = vector.broadcast %cst_26 : f32 to vector<16x1xf32>
    %58 = arith.subf %43, %57 : vector<16x1xf32>
    %59 = arith.select %56, %54, %58 : vector<16x1xi1>, vector<16x1xf32>
    %cst_27 = arith.constant 0.000000e+00 : f32
    %60 = vector.broadcast %cst_27 : f32 to vector<16x16xf32>
    %61 = arith.cmpf ogt, %40, %60 : vector<16x16xf32>
    %62 = vector.shape_cast %59 : vector<16x1xf32> to vector<16x1xf32>
    %63 = vector.broadcast %62 : vector<16x1xf32> to vector<16x16xf32>
    %64 = arith.select %61, %63, %30 : vector<16x16xi1>, vector<16x16xf32>
    %cst_28 = arith.constant 6.400000e+01 : f32
    %65 = vector.broadcast %cst_28 : f32 to vector<16x16xf32>
    %66 = arith.mulf %64, %65 : vector<16x16xf32>
    %c0_29 = arith.constant 0 : index
    %c0_30 = arith.constant 0 : index
    %67 = vector.load %arg3[%c0_29, %c0_30] : memref<16x16xf32, #tpu.memory_space<vmem>>, vector<16x16xf32>
    tpu.vector_store %arg3[%c0_29, %c0_30], %66 {strides = array<i32>} : memref<16x16xf32, #tpu.memory_space<vmem>>, vector<16x16xf32>,
    %cst_31 = arith.constant dense<0xFF800000> : vector<16xf32>
    %68 = vector.multi_reduction <maximumf>, %66, %cst_31 [1] : vector<16x16xf32> to vector<16xf32>
    %69 = vector.shape_cast %68 : vector<16xf32> to vector<16x1xf32>
    %70 = vector.broadcast %69 : vector<16x1xf32> to vector<16x16xf32>
    %71 = arith.subf %66, %70 : vector<16x16xf32>
    %72 = math.exp %71 : vector<16x16xf32>
    %cst_32 = arith.constant dense<0.000000e+00> : vector<16xf32>
    %73 = vector.multi_reduction <add>, %72, %cst_32 [1] : vector<16x16xf32> to vector<16xf32>
    %74 = vector.shape_cast %73 : vector<16xf32> to vector<16x1xf32>
    %75 = math.log %74 : vector<16x1xf32>
    %76 = arith.addf %69, %75 : vector<16x1xf32>
    %77 = arith.mulf %66, %40 : vector<16x16xf32>
    %cst_33 = arith.constant dense<0.000000e+00> : vector<16xf32>
    %78 = vector.multi_reduction <add>, %77, %cst_33 [1] : vector<16x16xf32> to vector<16xf32>
    %79 = vector.shape_cast %78 : vector<16xf32> to vector<16x1xf32>
    %80 = arith.subf %76, %79 : vector<16x1xf32>
    %81 = vector.shape_cast %80 : vector<16x1xf32> to vector<1x16x1xf32>
    %cst_34 = arith.constant dense<0.000000e+00> : vector<1xf32>
    %82 = vector.multi_reduction <add>, %81, %cst_34 [1, 2] : vector<1x16x1xf32> to vector<1xf32>
    %83 = vector.shape_cast %82 : vector<1xf32> to vector<1x1x1xf32>
    %84 = vector.extract %83[0, 0, 0] : f32 from vector<1x1x1xf32>
    %cst_35 = arith.constant 6.250000e-02 : f32
    %85 = arith.mulf %84, %cst_35 : f32
    %c0_36 = arith.constant 0 : index
    %c0_37 = arith.constant 0 : index
    %86 = memref.load %arg6[%c0_36, %c0_37] : memref<1x1xf32, #tpu.memory_space<smem>>
    memref.store %85, %arg6[%c0_36, %c0_37] : memref<1x1xf32, #tpu.memory_space<smem>>
    return
  }
}

</mosaic_0001>

<llo_original>
// kernel: arcface_forward.1
$region0: #{arcface_forward.1}
  #allocation0 [shape = 'u32[]', space=smem, size = 0x4, offset = 0x4, fixed_abs, tag = 'smem constant byte address 0x4 - core index']
  #allocation1 [shape = 'u32[72,128]{1,0:T(1,128)}', space=vmem, size = 0x9000, scoped, tag = 'internal scratch']
  %s0 = inlined_call_operand.vmem [shape: s32[16,1], index: 0, kind: input, shape index: {}]
  %s1 = inlined_call_operand.vmem [shape: f32[16,32], index: 1, kind: input, shape index: {}]
  %s2 = inlined_call_operand.hbm [shape: f32[16,32], index: 2, kind: input, shape index: {}]
  %s3 = inlined_call_operand.hbm [shape: f32[16,16], index: 3, kind: output, shape index: {0}]
  %s4 = inlined_call_operand.vmem [shape: f32[16,16], index: 4, kind: output, shape index: {1}]
  %s5 = inlined_call_operand.vmem [shape: f32[16,16], index: 5, kind: output, shape index: {2}]
  %s6 = inlined_call_operand.hbm [shape: f32[1,1], index: 6, kind: output, shape index: {3}]
  %7 = xla_tuple %s3, %s4, %s5, %s6
  %s8 = sld [smem:[#allocation0]]
  $region50: #{arcface_forward.1} parent=0
    _
  %s10 = ssub.s32 1, %s8
  %s11 = scalar_select 0, %s10, %s8
  $region1: #{arcface_forward.1} parent=0
    #allocation2 [shape = 'u8[8192]{0}', space=vmem, size = 0x2000, scoped, tag = 'input window, operand 2, single buffered']
    #allocation3 [shape = 's32[1]{0}', space=sflag, size = 0x4, scoped, tag = 'scoped memory for arcface_forward.1']
    #allocation4 [shape = 's32[1]{0}', space=sflag, size = 0x4, scoped, tag = 'scoped memory for arcface_forward.1']
    #allocation5 [shape = 's32[1]{0}', space=sflag, size = 0x4, scoped, tag = 'scoped memory for arcface_forward.1']
    #allocation6 [shape = 'u8[8192]{0}', space=vmem, size = 0x2000, scoped, tag = 'output window, operand 0, single buffered']
    #allocation7 [shape = 'u8[512]{0}', space=smem, size = 0x200, scoped, tag = 'output window, operand 3, single buffered']
    %12 = vsyncpa [#allocation3], 0
    %13 = vsyncpa [#allocation4], 0
    %14 = vsyncpa [#allocation5], 0
    // Predicated region
    $region2: #{arcface_forward.1} parent=1 // pred_check
      _
    $region3: #{arcface_forward.1} parent=1 // pred_check_branch
      %16 = sbr.rel (0) target = $region5
    $region4: #{arcface_forward.1} parent=1 // pred_region
      _
    $region5: #{arcface_forward.1} parent=1 // pred_fallthru
      _
    // Predicated region
    $region6: #{arcface_forward.1} parent=1 // pred_check
      _
    $region7: #{arcface_forward.1} parent=1 // pred_check_branch
      %18 = sbr.rel (0) target = $region9
    $region8: #{arcface_forward.1} parent=1 // pred_region
      _
    $region9: #{arcface_forward.1} parent=1 // pred_fallthru
      _
    // Predicated region
    $region10: #{arcface_forward.1} parent=1 // pred_check
      _
    $region11: #{arcface_forward.1} parent=1 // pred_check_branch
      %20 = sbr.rel (0) target = $region13
    $region12: #{arcface_forward.1} parent=1 // pred_region
      %22 = vsyncadd [#allocation3], 0
      %s23 = sshll.u32 %s2, 4
      %s24 = int_to_ptr.hbm [resolvable:$true] %s23
      %s25 = sshll.u32 [#allocation2], 4
      %s26 = int_to_ptr.vmem [resolvable:$true] %s25
      %31 = dma.hbm_to_vmem [thread:$0]  %s24, 256, %s26, [#allocation3], 128, 128, 8
    $region13: #{arcface_forward.1} parent=1 // pred_fallthru
      _
    // Predicated region
    $region14: #{arcface_forward.1} parent=1 // pred_check
      _
    $region15: #{arcface_forward.1} parent=1 // pred_check_branch
      %33 = sbr.rel (0) target = $region17
    $region16: #{arcface_forward.1} parent=1 // pred_region
      %35 = dma.done [#allocation3], 256
    $region17: #{arcface_forward.1} parent=1 // pred_fallthru
      _
    %v36 = vld [vmem:[%s1] sm:$0xff]
    %v37 = vld [vmem:[%s1 + $0x8] sm:$0xff]
    %v38 = vld [vmem:[#allocation2] sm:$0xff]
    %v39 = vld [vmem:[#allocation2 + $0x8] sm:$0xff]
    %v40 = vld [vmem:[%s0] sm:$0xff]
    %v41 = vld [vmem:[%s0 + $0x8] sm:$0xff]
    %v42 = vmul.f32 %v36, %v36
    %v43 = vmul.f32 %v37, %v37
    %vm44 = vcmask 261120
    %v45 = vsel %vm44, %v42, 0.0
    %46 = vadd.xlane.f32.xlu0 %v45
    %v47 = vpop.xlane.xlu0 %46
    %v48 = vsel %vm44, %v43, 0.0
    %49 = vadd.xlane.f32.xlu0 %v48
    %v50 = vpop.xlane.xlu0 %49
    %v51 = vmax.f32 %v47, 1e-24
    %v52 = vmax.f32 %v50, 1e-24
    %v53 = vrsqrt.pop %v51
    %v54 = vmul.f32 %v53, %v51
    %v55 = vmul.f32 %v54, %v53
    %v56 = vmul.f32 0.5, %v55
    %v57 = vsub.f32 1.5, %v56
    %v58 = vmul.f32 %v53, %v57
    %vm59 = vweird.f32 %v51
    %vm60 = vweird.f32 %v53
    %vm61 = vmor %vm59, %vm60
    %v62 = vsel %vm61, %v53, %v58
    %v63 = vrsqrt.pop %v52
    %v64 = vmul.f32 %v63, %v52
    %v65 = vmul.f32 %v64, %v63
    %v66 = vmul.f32 0.5, %v65
    %v67 = vsub.f32 1.5, %v66
    %v68 = vmul.f32 %v63, %v67
    %vm69 = vweird.f32 %v52
    %vm70 = vweird.f32 %v63
    %vm71 = vmor %vm69, %vm70
    %v72 = vsel %vm71, %v63, %v68
    %v73 = vmul.f32 %v36, %v62
    %v74 = vmul.f32 %v37, %v72
    %v75 = vmul.f32 %v38, %v38
    %v76 = vmul.f32 %v39, %v39
    %v77 = vsel %vm44, %v75, 0.0
    %78 = vadd.xlane.f32.xlu0 %v77
    %v79 = vpop.xlane.xlu0 %78
    %v80 = vsel %vm44, %v76, 0.0
    %81 = vadd.xlane.f32.xlu0 %v80
    %v82 = vpop.xlane.xlu0 %81
    %v83 = vmax.f32 %v79, 1e-24
    %v84 = vmax.f32 %v82, 1e-24
    %v85 = vrsqrt.pop %v83
    %v86 = vmul.f32 %v85, %v83
    %v87 = vmul.f32 %v86, %v85
    %v88 = vmul.f32 0.5, %v87
    %v89 = vsub.f32 1.5, %v88
    %v90 = vmul.f32 %v85, %v89
    %vm91 = vweird.f32 %v83
    %vm92 = vweird.f32 %v85
    %vm93 = vmor %vm91, %vm92
    %v94 = vsel %vm93, %v85, %v90
    %v95 = vrsqrt.pop %v84
    %v96 = vmul.f32 %v95, %v84
    %v97 = vmul.f32 %v96, %v95
    %v98 = vmul.f32 0.5, %v97
    %v99 = vsub.f32 1.5, %v98
    %v100 = vmul.f32 %v95, %v99
    %vm101 = vweird.f32 %v84
    %vm102 = vweird.f32 %v95
    %vm103 = vmor %vm101, %vm102
    %v104 = vsel %vm103, %v95, %v100
    %v105 = vmul.f32 %v38, %v94
    %v106 = vmul.f32 %v39, %v104
    %v108 = vsel %vm44, %v73, 0
    %v111 = vsel %vm44, %v74, 0
    %v114 = vsel %vm44, %v105, 0
    %v117 = vsel %vm44, %v106, 0
    %119 = vmatpush.xpose.msra.mxu0 0.0
    %120 = vmatpush.xpose.msra.mxu0 0.0
    %121 = vmatpush.xpose.msra.mxu0 0.0
    %122 = vmatpush.xpose.msra.mxu0 0.0
    %123 = vmatpush.xpose.msra.mxu0 0.0
    %124 = vmatpush.xpose.msra.mxu0 0.0
    %125 = vmatpush.xpose.msra.mxu0 0.0
    %126 = vmatpush.xpose.msra.mxu0 0.0
    %127 = vmatpush.xpose.msra.mxu0 0.0
    %128 = vmatpush.xpose.msra.mxu0 0.0
    %129 = vmatpush.xpose.msra.mxu0 0.0
    %130 = vmatpush.xpose.msra.mxu0 0.0
    %131 = vmatpush.xpose.msra.mxu0 0.0
    %132 = vmatpush.xpose.msra.mxu0 0.0
    %133 = vmatpush.xpose.msra.mxu0 %v117
    %134 = vmatpush.xpose.msra.mxu0 %v114
    %135 = vmatmul.f32.gmra.mxu0 %v108
    %v136 = vpop.f32.mrf.mxu0
    %v137 = vadd.f32 0.0, %v136
    %138 = vmatmul.f32.gmra.mxu0 %v111
    %v139 = vpop.f32.mrf.mxu0
    %v140 = vadd.f32 0.0, %v139
    %141 = vdwg.mxu0
    %vm142 = vcmask 130048
    %143 = vst.msk [vmem:[%s4] sm:$0xff] %vm142, %v137
    %144 = vst.msk [vmem:[%s4 + $0x8] sm:$0xff] %vm142, %v140
    %145 = vmatpush.xpose.msra.mxu0 0.0
    %146 = vmatpush.xpose.msra.mxu0 0.0
    %147 = vmatpush.xpose.msra.mxu0 0.0
    %148 = vmatpush.xpose.msra.mxu0 0.0
    %149 = vmatpush.xpose.msra.mxu0 0.0
    %150 = vmatpush.xpose.msra.mxu0 0.0
    %151 = vmatpush.xpose.msra.mxu0 0.0
    %152 = vmatpush.xpose.msra.mxu0 0.0
    %153 = vmatpush.xpose.msra.mxu0 0.0
    %154 = vmatpush.xpose.msra.mxu0 0.0
    %155 = vmatpush.xpose.msra.mxu0 0.0
    %156 = vmatpush.xpose.msra.mxu0 0.0
    %157 = vmatpush.xpose.msra.mxu0 0.0
    %158 = vmatpush.xpose.msra.mxu0 0.0
    %159 = vmatpush.xpose.msra.mxu0 %v117
    %160 = vmatpush.xpose.msra.mxu0 %v114
    %161 = vmatmul.f32.gmra.mxu0 %v114
    %v162 = vpop.f32.mrf.mxu0
    %v163 = vadd.f32 0.0, %v162
    %164 = vmatmul.f32.gmra.mxu0 %v117
    %v165 = vpop.f32.mrf.mxu0
    %v166 = vadd.f32 0.0, %v165
    %167 = vdwg.mxu0
    %v168 = vmax.f32 %v163, -0.9999
    %v169 = vmax.f32 %v166, -0.9999
    %v170 = vmin.f32 %v168, 0.9999
    %v171 = vmin.f32 %v169, 0.9999
    %172 = vst.msk [vmem:[%s5] sm:$0xff] %vm142, %v170
    %173 = vst.msk [vmem:[%s5 + $0x8] sm:$0xff] %vm142, %v171
    %v174 = vmax.f32 %v137, -0.9999
    %v175 = vmax.f32 %v140, -0.9999
    %v176 = vmin.f32 %v174, 0.9999
    %v177 = vmin.f32 %v175, 0.9999
    %v178 = vlaneseq
    %v179 = vand.u32 %v178, 127
    %vm180 = vcmp.ne.s32.totalorder %v40, 4294967295
    %vm181 = vcmp.ne.s32.totalorder %v41, 4294967295
    %182 = vset.pattern.permute.xlu0 0
    %183 = vperm.xlu0 %182, %v40
    %v184 = vpop.permute.xlu0 %183
    %185 = vset.pattern.permute.xlu0 0
    %186 = vperm.xlu0 %185, %v41
    %v187 = vpop.permute.xlu0 %186
    %vm188 = vcmp.eq.s32.totalorder %v179, %v184
    %vm189 = vcmp.eq.s32.totalorder %v179, %v187
    %v190 = vsel %vm180, 1, 0
    %v191 = vsel %vm181, 1, 0
    %192 = vset.pattern.permute.xlu0 0
    %193 = vperm.xlu0 %192, %v190
    %v194 = vpop.permute.xlu0 %193
    %195 = vset.pattern.permute.xlu0 0
    %196 = vperm.xlu0 %195, %v191
    %v197 = vpop.permute.xlu0 %196
    %vm198 = vcmp.eq.s32.totalorder %v194, 1
    %vm199 = vcmp.eq.s32.totalorder %v197, 1
    %vm200 = vmand %vm188, %vm198
    %vm201 = vmand %vm189, %vm199
    %v202 = vsel %vm200, 1.0, 0.0
    %v203 = vsel %vm201, 1.0, 0.0
    %v204 = vmul.f32 %v176, %v202
    %v205 = vmul.f32 %v177, %v203
    %v206 = vsel %vm142, %v204, 0.0
    %207 = vadd.xlane.f32.xlu0 %v206
    %v208 = vpop.xlane.xlu0 %207
    %v209 = vsel %vm142, %v205, 0.0
    %210 = vadd.xlane.f32.xlu0 %v209
    %v211 = vpop.xlane.xlu0 %210
    %v212 = vmul.f32 %v208, %v208
    %v213 = vmul.f32 %v211, %v211
    %v214 = vsub.f32 1.0, %v212
    %v215 = vsub.f32 1.0, %v213
    %v216 = vmax.f32 %v214, 0.0
    %v217 = vmax.f32 %v215, 0.0
    %v218 = vrsqrt.pop %v216
    %v219 = vmul.f32 %v218, %v216
    %v220 = vmul.f32 %v219, %v218
    %v221 = vmul.f32 0.5, %v220
    %v222 = vsub.f32 1.5, %v221
    %v223 = vmul.f32 %v218, %v222
    %v224 = vmul.f32 %v216, %v223
    %vm225 = vcmp.eq.f32.partialorder %v216, inf
    %v226 = vsel %vm225, %v216, %v224
    %vm227 = vcmp.eq.f32.partialorder %v216, 0.0
    %v228 = vand.u32 %v216, 2147483648
    %v229 = vsel %vm227, %v228, %v226
    %v230 = vrsqrt.pop %v217
    %v231 = vmul.f32 %v230, %v217
    %v232 = vmul.f32 %v231, %v230
    %v233 = vmul.f32 0.5, %v232
    %v234 = vsub.f32 1.5, %v233
    %v235 = vmul.f32 %v230, %v234
    %v236 = vmul.f32 %v217, %v235
    %vm237 = vcmp.eq.f32.partialorder %v217, inf
    %v238 = vsel %vm237, %v217, %v236
    %vm239 = vcmp.eq.f32.partialorder %v217, 0.0
    %v240 = vand.u32 %v217, 2147483648
    %v241 = vsel %vm239, %v240, %v238
    %v242 = vmul.f32 %v208, 0.87758255
    %v243 = vmul.f32 %v211, 0.87758255
    %v244 = vmul.f32 %v229, 0.47942555
    %v245 = vmul.f32 %v241, 0.47942555
    %v246 = vsub.f32 %v242, %v244
    %v247 = vsub.f32 %v243, %v245
    %vm248 = vcmp.gt.f32.partialorder %v208, -0.87758255
    %vm249 = vcmp.gt.f32.partialorder %v211, -0.87758255
    %v250 = vsub.f32 %v208, 0.23971277
    %v251 = vsub.f32 %v211, 0.23971277
    %v252 = vsel %vm248, %v246, %v250
    %v253 = vsel %vm249, %v247, %v251
    %vm254 = vcmp.gt.f32.partialorder %v202, 0.0
    %vm255 = vcmp.gt.f32.partialorder %v203, 0.0
    %v256 = vsel %vm254, %v252, %v176
    %v257 = vsel %vm255, %v253, %v177
    %v258 = vmul.f32 %v256, 64.0
    %v259 = vmul.f32 %v257, 64.0
    %260 = vst.msk [vmem:[#allocation6] sm:$0xff] %vm142, %v258
    %261 = vst.msk [vmem:[#allocation6 + $0x8] sm:$0xff] %vm142, %v259
    %v262 = vsel %vm142, %v258, -inf
    %263 = vmax.xlane.f32.xlu0 %v262
    %v264 = vpop.xlane.xlu0 %263
    %v265 = vsel %vm142, %v259, -inf
    %266 = vmax.xlane.f32.xlu0 %v265
    %v267 = vpop.xlane.xlu0 %266
    %v268 = vsub.f32 %v258, %v264
    %v269 = vsub.f32 %v259, %v267
    %v270 = vmul.f32 %v268, 1.442695
    %v271 = vpow.pop %v270
    %v272 = vmul.f32 %v269, 1.442695
    %v273 = vpow.pop %v272
    %v274 = vsel %vm142, %v271, 0.0
    %275 = vadd.xlane.f32.xlu0 %v274
    %v276 = vpop.xlane.xlu0 %275
    %v277 = vsel %vm142, %v273, 0.0
    %278 = vadd.xlane.f32.xlu0 %v277
    %v279 = vpop.xlane.xlu0 %278
    %v280 = vlog2.pop %v276
    %v281 = vmul.f32 %v280, 0.6931472
    %v282 = vlog2.pop %v279
    %v283 = vmul.f32 %v282, 0.6931472
    %v284 = vadd.f32 %v264, %v281
    %v285 = vadd.f32 %v267, %v283
    %v286 = vmul.f32 %v258, %v202
    %v287 = vmul.f32 %v259, %v203
    %v288 = vsel %vm142, %v286, 0.0
    %289 = vadd.xlane.f32.xlu0 %v288
    %v290 = vpop.xlane.xlu0 %289
    %v291 = vsel %vm142, %v287, 0.0
    %292 = vadd.xlane.f32.xlu0 %v291
    %v293 = vpop.xlane.xlu0 %292
    %v294 = vsub.f32 %v284, %v290
    %v295 = vsub.f32 %v285, %v293
    %vm296 = vcmask 7168
    %v297 = vsel %vm296, %v294, 0.0
    %v298 = vsel %vm296, %v295, 0.0
    %v299 = vadd.f32 %v297, %v298
    %300 = vadd.xlane.f32.xlu0 %v299
    %v301 = vpop.xlane.xlu0 %300
    %v302 = vrot.slane %v301, 4
    %v303 = vadd.f32 %v301, %v302
    %v304 = vrot.slane %v303, 2
    %v305 = vadd.f32 %v303, %v304
    %v306 = vrot.slane %v305, 1
    %v307 = vadd.f32 %v305, %v306
    %s308 = vtos %v307
    %s309 = smul.f32 %s308, 0.0625
    %s310 = scalar_lea.smem [#allocation7], 0
    %311 = sst [smem:[%s310]] %s309
    // Predicated region
    $region18: #{arcface_forward.1} parent=1 // pred_check
      _
    $region19: #{arcface_forward.1} parent=1 // pred_check_branch
      %313 = sbr.rel (0) target = $region21
    $region20: #{arcface_forward.1} parent=1 // pred_region
      %315 = vsyncadd [#allocation4], 0
      %s316 = sshll.u32 [#allocation6], 4
      %s317 = int_to_ptr.vmem [resolvable:$true] %s316
      %s318 = sshll.u32 %s3, 4
      %s319 = int_to_ptr.hbm [resolvable:$true] %s318
      %324 = dma.vmem_to_hbm [thread:$0]  %s317, 256, %s319, [#allocation4], 128, 128, 8
    $region21: #{arcface_forward.1} parent=1 // pred_fallthru
      _
    // Predicated region
    $region22: #{arcface_forward.1} parent=1 // pred_check
      _
    $region23: #{arcface_forward.1} parent=1 // pred_check_branch
      %326 = sbr.rel (0) target = $region25
    $region24: #{arcface_forward.1} parent=1 // pred_region
      _
    $region25: #{arcface_forward.1} parent=1 // pred_fallthru
      _
    // Predicated region
    $region26: #{arcface_forward.1} parent=1 // pred_check
      _
    $region27: #{arcface_forward.1} parent=1 // pred_check_branch
      %328 = sbr.rel (0) target = $region29
    $region28: #{arcface_forward.1} parent=1 // pred_region
      _
    $region29: #{arcface_forward.1} parent=1 // pred_fallthru
      _
    // Predicated region
    $region30: #{arcface_forward.1} parent=1 // pred_check
      _
    $region31: #{arcface_forward.1} parent=1 // pred_check_branch
      %330 = sbr.rel (0) target = $region33
    $region32: #{arcface_forward.1} parent=1 // pred_region
      %332 = vsyncadd [#allocation5], 0
      %s334 = sshll.u32 %s6, 4
      %s335 = int_to_ptr.hbm [resolvable:$true] %s334
      %337 = dma.smem_to_hbm [#allocation7], 16, %s335, [#allocation5]
    $region33: #{arcface_forward.1} parent=1 // pred_fallthru
      _
    // Predicated region
    $region34: #{arcface_forward.1} parent=1 // pred_check
      _
    $region35: #{arcface_forward.1} parent=1 // pred_check_branch
      %339 = sbr.rel (0) target = $region37
    $region36: #{arcface_forward.1} parent=1 // pred_region
      %341 = dma.done [#allocation4], 256
    $region37: #{arcface_forward.1} parent=1 // pred_fallthru
      _
    // Predicated region
    $region38: #{arcface_forward.1} parent=1 // pred_check
      _
    $region39: #{arcface_forward.1} parent=1 // pred_check_branch
      %343 = sbr.rel (0) target = $region41
    $region40: #{arcface_forward.1} parent=1 // pred_region
      _
    $region41: #{arcface_forward.1} parent=1 // pred_fallthru
      _
    // Predicated region
    $region42: #{arcface_forward.1} parent=1 // pred_check
      _
    $region43: #{arcface_forward.1} parent=1 // pred_check_branch
      %345 = sbr.rel (0) target = $region45
    $region44: #{arcface_forward.1} parent=1 // pred_region
      _
    $region45: #{arcface_forward.1} parent=1 // pred_fallthru
      _
    // Predicated region
    $region46: #{arcface_forward.1} parent=1 // pred_check
      _
    $region47: #{arcface_forward.1} parent=1 // pred_check_branch
      %347 = sbr.rel (0) target = $region49
    $region48: #{arcface_forward.1} parent=1 // pred_region
      %349 = dma.done [#allocation5], 16
    $region49: #{arcface_forward.1} parent=1 // pred_fallthru
      _
    %350 = sfence
    %351 = vsyncpa [#allocation3], 1
    %352 = vsyncpa [#allocation4], 1
    %353 = vsyncpa [#allocation5], 1

</llo_original>
